<compile_context>
chip_gen: v5e
topology: v5e:2x2
jax: 0.10.0
libtpu: 0.0.40
codegen_flags: <defaults>
</compile_context>

<pallas_src>
import jax
import jax.numpy as jnp
from jax import lax
from jax.experimental import pallas as pl
from jax.experimental.pallas import tpu as pltpu


# ----------------------------- kernel helpers --------------------------------

def _mish(x):
    # mish(x) = x * tanh(softplus(x)) = x * (e^2 + 2e) / (e^2 + 2e + 2), e = exp(x)
    e = jnp.exp(x)
    n = e * (e + 2.0)
    y = x * (n * pl.reciprocal(n + 2.0, approx=True))
    # For large x the rational form overflows (exp(x)^2 -> inf); mish(x) -> x there.
    return jnp.where(x > 20.0, x, y)


def base_model_kernel(x_ref, w1t_ref, t1_ref, t2_ref, vec_ref, out_ref):
    x = x_ref[...]                                   # (TB, 84) f32

    b1   = vec_ref[0:1, 0:16]                        # fc1 bias            (1, 16)
    bc1f = vec_ref[1:2, :]                           # conv1 bias, dilated (1, 128)
    bc2f = vec_ref[2:3, :]                           # conv2 bias, dilated (1, 128)
    w2d  = vec_ref[3:4, :]                           # fc2 weight, dilated (1, 128)
    b2   = vec_ref[4:5, 0:1]                         # fc2 bias            (1, 1)

    # ---- fc1 + mish (bf16 operands, f32 accumulate) ------------------------
    h = _mish(jnp.dot(x.astype(jnp.bfloat16), w1t_ref[...],
                      preferred_element_type=jnp.float32) + b1)          # (TB, 16)

    # ---- conv1 (1->8 ch, k=3, p=1) as a Toeplitz matmul; lanes = c*16 + p --
    h1 = _mish(jnp.dot(h.astype(jnp.bfloat16), t1_ref[...],
                       preferred_element_type=jnp.float32) + bc1f)       # (TB, 128)

    # ---- MaxPool1d(k=3, s=3): window-max lands at the window's MIDDLE lane
    #      c*16 + 3q + 1. Using both rotation directions makes the result
    #      independent of the hardware vrot direction.
    pooled = jnp.maximum(h1, jnp.maximum(pltpu.roll(h1, 1, 1),
                                         pltpu.roll(h1, 127, 1)))        # (TB, 128)

    # ---- conv2 (8->16 ch, k=3, p=1): banded matmul; non-pooled lanes have
    #      zero rows in T2, so garbage lanes never contribute. Output lanes
    #      o*5 + r, padded with zero columns to a full 128-lane vreg.
    h2 = _mish(jnp.dot(pooled.astype(jnp.bfloat16), t2_ref[...],
                       preferred_element_type=jnp.float32) + bc2f)       # (TB, 128)

    # ---- global max over the 5 positions per channel; valid at lane o*5 + 2
    m = jnp.maximum(h2, jnp.maximum(pltpu.roll(h2, 1, 1), pltpu.roll(h2, 127, 1)))
    m = jnp.maximum(m,  jnp.maximum(pltpu.roll(h2, 2, 1), pltpu.roll(h2, 126, 1)))

    # ---- fc2: w2d is zero except at lanes o*5 + 2 (holds fc2.weight[0, o]) --
    out_ref[...] = jnp.sum(m * w2d, axis=1, keepdims=True) + b2          # (TB, 1)


# ----------------------------- parameters ------------------------------------

def init_params(key):
    """PyTorch-default-style init (uniform +/- 1/sqrt(fan_in)), PyTorch layouts."""
    ks = jax.random.split(key, 8)

    def u(k, shape, fan_in):
        b = 1.0 / jnp.sqrt(jnp.float32(fan_in))
        return jax.random.uniform(k, shape, jnp.float32, -b, b)

    return dict(
        W1=u(ks[0], (16, 84), 84),    b1=u(ks[1], (16,), 84),
        Wc1=u(ks[2], (8, 1, 3), 3),   bc1=u(ks[3], (8,), 3),
        Wc2=u(ks[4], (16, 8, 3), 24), bc2=u(ks[5], (16,), 24),
        W2=u(ks[6], (1, 16), 16),     b2=u(ks[7], (1,), 16),
    )


def pack_params(p):
    """Repack PyTorch-layout params into the kernel's matmul-friendly arrays."""
    Wc1 = p["Wc1"].reshape(8, 3)
    Wc2, W2 = p["Wc2"], p["W2"]

    # Matmul operands in bf16 (MXU-native); biases stay f32.
    w1t = p["W1"].T.astype(jnp.bfloat16)                       # (84, 16)

    # conv1 Toeplitz: T1[j, c*16 + q] = Wc1[c, j - q + 1]  (tap index in [0,3))
    j = jnp.arange(16)[:, None, None]
    c = jnp.arange(8)[None, :, None]
    q = jnp.arange(16)[None, None, :]
    k = j - q + 1
    t1 = jnp.where((k >= 0) & (k <= 2), Wc1[c, jnp.clip(k, 0, 2)], 0.0)
    t1 = t1.reshape(16, 128).astype(jnp.bfloat16)              # (16, 128)

    # conv2 banded matmul over the dilated pooled layout. Pooled window q of
    # channel i lives at input lane i*16 + 3q + 1 (middle of the window).
    # Output lanes: o*5 + r, padded with zero columns to 128.
    li = jnp.arange(128)
    i_ch, rem = li // 16, li % 16
    is_pool = (rem % 3 == 1) & (rem <= 13)                     # pooled lanes
    qq = (rem - 1) // 3
    lo = jnp.arange(80)
    o_ch, r = lo // 5, lo % 5
    kk = qq[:, None] - r[None, :] + 1
    valid = is_pool[:, None] & (kk >= 0) & (kk <= 2)
    t2 = jnp.where(valid, Wc2[o_ch[None, :], i_ch[:, None], jnp.clip(kk, 0, 2)], 0.0)
    t2 = jnp.pad(t2, ((0, 0), (0, 48))).astype(jnp.bfloat16)   # (128, 128)

    # packed bias / small-weight vectors -> one (8, 128) f32 tile
    vecs = jnp.zeros((8, 128), jnp.float32)
    vecs = vecs.at[0, 0:16].set(p["b1"])
    vecs = vecs.at[1, :].set(jnp.repeat(p["bc1"], 16))          # conv1 bias, lanes c*16+q
    vecs = vecs.at[2, 0:80].set(jnp.repeat(p["bc2"], 5))        # conv2 bias, lanes o*5+r
    vecs = vecs.at[3, jnp.arange(16) * 5 + 2].set(W2[0])        # fc2 weight at lanes o*5+2
    vecs = vecs.at[4, 0].set(p["b2"][0])

    return w1t, t1, t2, vecs


# ----------------------------- wrapper ----------------------------------------

def _round_up(n, m):
    return ((n + m - 1) // m) * m


def base_model_forward(x, kernel_params, tile_b=1024, min_grid_steps=8):
    w1t, t1, t2, vecs = kernel_params
    x = x.astype(jnp.float32)
    B = x.shape[0]

    # Batch tile: as large as `tile_b` (multiple of 8 sublanes), but capped so
    # there are always >= `min_grid_steps` grid steps (keeps both v7x
    # TensorCores busy on the "parallel" batch axis). No wrapper-side padding:
    # the last block may be partial (rows are fully independent).
    cap = _round_up(pl.cdiv(B, min_grid_steps), 8)
    TB = max(8, min(_round_up(tile_b, 8), cap))
    grid = (pl.cdiv(B, TB),)

    def const_spec(a):
        return pl.BlockSpec(a.shape, lambda i, _n=a.ndim: (0,) * _n)

    out = pl.pallas_call(
        base_model_kernel,
        out_shape=jax.ShapeDtypeStruct((B, 1), jnp.float32),
        grid=grid,
        in_specs=[
            pl.BlockSpec((TB, 84), lambda i: (i, 0)),
            const_spec(w1t), const_spec(t1), const_spec(t2), const_spec(vecs),
        ],
        out_specs=pl.BlockSpec((TB, 1), lambda i: (i, 0)),
        compiler_params=pltpu.CompilerParams(dimension_semantics=("parallel",)),
    )(x, w1t, t1, t2, vecs)
    return out


# ----------------------------- reference & demo --------------------------------

def reference_forward(x, p):
    """Independent pure-JAX (f32) reference using lax conv / reduce_window."""
    def mish(v):
        return v * jnp.tanh(jax.nn.softplus(v))

    x = x.astype(jnp.float32)
    B = x.shape[0]
    h = mish(x @ p["W1"].T + p["b1"])                           # (B, 16)
    h = h.reshape(B, 1, 16)
    c1 = lax.conv_general_dilated(h, p["Wc1"], (1,), ((1, 1),),
                                  dimension_numbers=("NCH", "OIH", "NCH"))
    c1 = mish(c1 + p["bc1"].reshape(1, 8, 1))                   # (B, 8, 16)
    pool = lax.reduce_window(c1, -jnp.inf, lax.max, (1, 1, 3), (1, 1, 3), "VALID")
    c2 = lax.conv_general_dilated(pool, p["Wc2"], (1,), ((1, 1),),
                                  dimension_numbers=("NCH", "OIH", "NCH"))
    c2 = mish(c2 + p["bc2"].reshape(1, 16, 1))                  # (B, 16, 5)
    m = jnp.max(c2, axis=2)                                     # (B, 16)
    return m @ p["W2"].T + p["b2"]                              # (B, 1)


if __name__ == "__main__":
    key = jax.random.PRNGKey(0)
    k_param, k_x = jax.random.split(key)
    params = init_params(k_param)
    kparams = pack_params(params)

    B = 300                       # not a multiple of 8 or the tile -> exercises the partial block
    x = jax.random.normal(k_x, (B, 84), jnp.float32)

    fwd = jax.jit(lambda xx: base_model_forward(xx, kparams))
    y = jax.block_until_ready(fwd(x))

    y_ref = reference_forward(x, params)
    assert y.shape == (B, 1), y.shape
    # bf16 matmul operands + approx reciprocal -> relaxed tolerance vs f32 reference.
    err = float(jnp.max(jnp.abs(y - y_ref)))
    assert jnp.allclose(y, y_ref, atol=5e-2, rtol=5e-2), err

    print("KERNEL_OK")
</pallas_src>

<mosaic_0001>
module attributes {stable_mosaic.version = 11 : i64} {
  func.func @base_model_kernel(%arg0: i32, %arg1: memref<40x84xf32, #tpu.memory_space<vmem>>, %arg2: memref<84x16xbf16, #tpu.memory_space<vmem>>, %arg3: memref<16x128xbf16, #tpu.memory_space<vmem>>, %arg4: memref<128x128xbf16, #tpu.memory_space<vmem>>, %arg5: memref<8x128xf32, #tpu.memory_space<vmem>>, %arg6: memref<40x1xf32, #tpu.memory_space<vmem>>) attributes {dimension_semantics = [#tpu.dimension_semantics<parallel>], iteration_bounds = array<i64: 8>, scalar_prefetch = 0 : i64, scratch_operands = 0 : i64, tpu.core_type = #tpu.core_type<tc>, window_params = [{transform_indices = @transform_0, window_bounds = array<i64: 40, 84>}, {pipeline_mode = #tpu.pipeline_mode<synchronous>, transform_indices = @transform_1, window_bounds = array<i64: 84, 16>}, {pipeline_mode = #tpu.pipeline_mode<synchronous>, transform_indices = @transform_2, window_bounds = array<i64: 16, 128>}, {pipeline_mode = #tpu.pipeline_mode<synchronous>, transform_indices = @transform_3, window_bounds = array<i64: 128, 128>}, {pipeline_mode = #tpu.pipeline_mode<synchronous>, transform_indices = @transform_4, window_bounds = array<i64: 8, 128>}, {transform_indices = @transform_5, window_bounds = array<i64: 40, 1>}]} {
    %c0 = arith.constant 0 : index
    %c0_0 = arith.constant 0 : index
    %0 = vector.load %arg1[%c0, %c0_0] : memref<40x84xf32, #tpu.memory_space<vmem>>, vector<40x84xf32>
    %c0_1 = arith.constant 0 : index
    %c0_2 = arith.constant 0 : index
    %1 = vector.load %arg5[%c0_1, %c0_2] : memref<8x128xf32, #tpu.memory_space<vmem>>, vector<1x16xf32>
    %c1 = arith.constant 1 : index
    %c0_3 = arith.constant 0 : index
    %2 = vector.load %arg5[%c1, %c0_3] : memref<8x128xf32, #tpu.memory_space<vmem>>, vector<1x128xf32>
    %c2 = arith.constant 2 : index
    %c0_4 = arith.constant 0 : index
    %3 = vector.load %arg5[%c2, %c0_4] : memref<8x128xf32, #tpu.memory_space<vmem>>, vector<1x128xf32>
    %c3 = arith.constant 3 : index
    %c0_5 = arith.constant 0 : index
    %4 = vector.load %arg5[%c3, %c0_5] : memref<8x128xf32, #tpu.memory_space<vmem>>, vector<1x128xf32>
    %c4 = arith.constant 4 : index
    %c0_6 = arith.constant 0 : index
    %5 = vector.load %arg5[%c4, %c0_6] : memref<8x128xf32, #tpu.memory_space<vmem>>, vector<1x1xf32>
    %6 = arith.truncf %0 : vector<40x84xf32> to vector<40x84xbf16>
    %c0_7 = arith.constant 0 : index
    %c0_8 = arith.constant 0 : index
    %7 = vector.load %arg2[%c0_7, %c0_8] : memref<84x16xbf16, #tpu.memory_space<vmem>>, vector<84x16xbf16>
    %cst = arith.constant dense<0.000000e+00> : vector<40x16xf32>
    %8 = tpu.matmul %6, %7, %cst {dimension_numbers = #tpu.dot_dimension_numbers<[1], [0], [0], [1], [0, 0, 1, 1], [], []>} : vector<40x84xbf16>, vector<84x16xbf16>, vector<40x16xf32> -> vector<40x16xf32>
    %9 = vector.broadcast %1 : vector<1x16xf32> to vector<40x16xf32>
    %10 = arith.addf %8, %9 : vector<40x16xf32>
    %11 = math.exp %10 : vector<40x16xf32>
    %cst_9 = arith.constant 2.000000e+00 : f32
    %12 = vector.broadcast %cst_9 : f32 to vector<40x16xf32>
    %13 = arith.addf %11, %12 : vector<40x16xf32>
    %14 = arith.mulf %11, %13 : vector<40x16xf32>
    %cst_10 = arith.constant 2.000000e+00 : f32
    %15 = vector.broadcast %cst_10 : f32 to vector<40x16xf32>
    %16 = arith.addf %14, %15 : vector<40x16xf32>
    %17 = tpu.reciprocal %16 {approx = true} : vector<40x16xf32> -> vector<40x16xf32>
    %18 = arith.mulf %14, %17 : vector<40x16xf32>
    %19 = arith.mulf %10, %18 : vector<40x16xf32>
    %cst_11 = arith.constant 2.000000e+01 : f32
    %20 = vector.broadcast %cst_11 : f32 to vector<40x16xf32>
    %21 = arith.cmpf ogt, %10, %20 : vector<40x16xf32>
    %22 = arith.select %21, %10, %19 : vector<40x16xi1>, vector<40x16xf32>
    %23 = arith.truncf %22 : vector<40x16xf32> to vector<40x16xbf16>
    %c0_12 = arith.constant 0 : index
    %c0_13 = arith.constant 0 : index
    %24 = vector.load %arg3[%c0_12, %c0_13] : memref<16x128xbf16, #tpu.memory_space<vmem>>, vector<16x128xbf16>
    %cst_14 = arith.constant dense<0.000000e+00> : vector<40x128xf32>
    %25 = tpu.matmul %23, %24, %cst_14 {dimension_numbers = #tpu.dot_dimension_numbers<[1], [0], [0], [1], [0, 0, 1, 1], [], []>} : vector<40x16xbf16>, vector<16x128xbf16>, vector<40x128xf32> -> vector<40x128xf32>
    %26 = vector.broadcast %2 : vector<1x128xf32> to vector<40x128xf32>
    %27 = arith.addf %25, %26 : vector<40x128xf32>
    %28 = math.exp %27 : vector<40x128xf32>
    %cst_15 = arith.constant 2.000000e+00 : f32
    %29 = vector.broadcast %cst_15 : f32 to vector<40x128xf32>
    %30 = arith.addf %28, %29 : vector<40x128xf32>
    %31 = arith.mulf %28, %30 : vector<40x128xf32>
    %cst_16 = arith.constant 2.000000e+00 : f32
    %32 = vector.broadcast %cst_16 : f32 to vector<40x128xf32>
    %33 = arith.addf %31, %32 : vector<40x128xf32>
    %34 = tpu.reciprocal %33 {approx = true} : vector<40x128xf32> -> vector<40x128xf32>
    %35 = arith.mulf %31, %34 : vector<40x128xf32>
    %36 = arith.mulf %27, %35 : vector<40x128xf32>
    %cst_17 = arith.constant 2.000000e+01 : f32
    %37 = vector.broadcast %cst_17 : f32 to vector<40x128xf32>
    %38 = arith.cmpf ogt, %27, %37 : vector<40x128xf32>
    %39 = arith.select %38, %27, %36 : vector<40x128xi1>, vector<40x128xf32>
    %c1_i32 = arith.constant 1 : i32
    %40 = tpu.dynamic_rotate %39 by %c1_i32 dim 1 : vector<40x128xf32>, i32 -> vector<40x128xf32>
    %c127_i32 = arith.constant 127 : i32
    %41 = tpu.dynamic_rotate %39 by %c127_i32 dim 1 : vector<40x128xf32>, i32 -> vector<40x128xf32>
    %42 = arith.maximumf %40, %41 : vector<40x128xf32>
    %43 = arith.maximumf %39, %42 : vector<40x128xf32>
    %44 = arith.truncf %43 : vector<40x128xf32> to vector<40x128xbf16>
    %c0_18 = arith.constant 0 : index
    %c0_19 = arith.constant 0 : index
    %45 = vector.load %arg4[%c0_18, %c0_19] : memref<128x128xbf16, #tpu.memory_space<vmem>>, vector<128x128xbf16>
    %cst_20 = arith.constant dense<0.000000e+00> : vector<40x128xf32>
    %46 = tpu.matmul %44, %45, %cst_20 {dimension_numbers = #tpu.dot_dimension_numbers<[1], [0], [0], [1], [0, 0, 1, 1], [], []>} : vector<40x128xbf16>, vector<128x128xbf16>, vector<40x128xf32> -> vector<40x128xf32>
    %47 = vector.broadcast %3 : vector<1x128xf32> to vector<40x128xf32>
    %48 = arith.addf %46, %47 : vector<40x128xf32>
    %49 = math.exp %48 : vector<40x128xf32>
    %cst_21 = arith.constant 2.000000e+00 : f32
    %50 = vector.broadcast %cst_21 : f32 to vector<40x128xf32>
    %51 = arith.addf %49, %50 : vector<40x128xf32>
    %52 = arith.mulf %49, %51 : vector<40x128xf32>
    %cst_22 = arith.constant 2.000000e+00 : f32
    %53 = vector.broadcast %cst_22 : f32 to vector<40x128xf32>
    %54 = arith.addf %52, %53 : vector<40x128xf32>
    %55 = tpu.reciprocal %54 {approx = true} : vector<40x128xf32> -> vector<40x128xf32>
    %56 = arith.mulf %52, %55 : vector<40x128xf32>
    %57 = arith.mulf %48, %56 : vector<40x128xf32>
    %cst_23 = arith.constant 2.000000e+01 : f32
    %58 = vector.broadcast %cst_23 : f32 to vector<40x128xf32>
    %59 = arith.cmpf ogt, %48, %58 : vector<40x128xf32>
    %60 = arith.select %59, %48, %57 : vector<40x128xi1>, vector<40x128xf32>
    %c1_i32_24 = arith.constant 1 : i32
    %61 = tpu.dynamic_rotate %60 by %c1_i32_24 dim 1 : vector<40x128xf32>, i32 -> vector<40x128xf32>
    %c127_i32_25 = arith.constant 127 : i32
    %62 = tpu.dynamic_rotate %60 by %c127_i32_25 dim 1 : vector<40x128xf32>, i32 -> vector<40x128xf32>
    %63 = arith.maximumf %61, %62 : vector<40x128xf32>
    %64 = arith.maximumf %60, %63 : vector<40x128xf32>
    %c2_i32 = arith.constant 2 : i32
    %65 = tpu.dynamic_rotate %60 by %c2_i32 dim 1 : vector<40x128xf32>, i32 -> vector<40x128xf32>
    %c126_i32 = arith.constant 126 : i32
    %66 = tpu.dynamic_rotate %60 by %c126_i32 dim 1 : vector<40x128xf32>, i32 -> vector<40x128xf32>
    %67 = arith.maximumf %65, %66 : vector<40x128xf32>
    %68 = arith.maximumf %64, %67 : vector<40x128xf32>
    %69 = vector.broadcast %4 : vector<1x128xf32> to vector<40x128xf32>
    %70 = arith.mulf %68, %69 : vector<40x128xf32>
    %cst_26 = arith.constant dense<0.000000e+00> : vector<40xf32>
    %71 = vector.multi_reduction <add>, %70, %cst_26 [1] : vector<40x128xf32> to vector<40xf32>
    %72 = vector.shape_cast %71 : vector<40xf32> to vector<40x1xf32>
    %73 = vector.broadcast %5 : vector<1x1xf32> to vector<40x1xf32>
    %74 = arith.addf %72, %73 : vector<40x1xf32>
    %c0_27 = arith.constant 0 : index
    %c0_28 = arith.constant 0 : index
    %75 = vector.load %arg6[%c0_27, %c0_28] : memref<40x1xf32, #tpu.memory_space<vmem>>, vector<40x1xf32>
    tpu.vector_store %arg6[%c0_27, %c0_28], %74 {strides = array<i32>} : memref<40x1xf32, #tpu.memory_space<vmem>>, vector<40x1xf32>,
    return
  }
  func.func @transform_0(%arg0: i32) -> (i32, i32) {
    %c0_i32 = arith.constant 0 : i32
    %c0_i32_0 = arith.constant 0 : i32
    return %arg0, %c0_i32 : i32, i32
  }
  func.func @transform_1(%arg0: i32) -> (i32, i32) {
    %c0_i32 = arith.constant 0 : i32
    %c0_i32_0 = arith.constant 0 : i32
    %c0_i32_1 = arith.constant 0 : i32
    return %c0_i32, %c0_i32_0 : i32, i32
  }
  func.func @transform_2(%arg0: i32) -> (i32, i32) {
    %c0_i32 = arith.constant 0 : i32
    %c0_i32_0 = arith.constant 0 : i32
    %c0_i32_1 = arith.constant 0 : i32
    return %c0_i32, %c0_i32_0 : i32, i32
  }
  func.func @transform_3(%arg0: i32) -> (i32, i32) {
    %c0_i32 = arith.constant 0 : i32
    %c0_i32_0 = arith.constant 0 : i32
    %c0_i32_1 = arith.constant 0 : i32
    return %c0_i32, %c0_i32_0 : i32, i32
  }
  func.func @transform_4(%arg0: i32) -> (i32, i32) {
    %c0_i32 = arith.constant 0 : i32
    %c0_i32_0 = arith.constant 0 : i32
    %c0_i32_1 = arith.constant 0 : i32
    return %c0_i32, %c0_i32_0 : i32, i32
  }
  func.func @transform_5(%arg0: i32) -> (i32, i32) {
    %c0_i32 = arith.constant 0 : i32
    %c0_i32_0 = arith.constant 0 : i32
    return %arg0, %c0_i32 : i32, i32
  }
}

</mosaic_0001>

<llo_original>
// kernel: _lambda_.1
$region0: #{_lambda_.1}
  #allocation0 [shape = 'u32[]', space=smem, size = 0x4, offset = 0x4, fixed_abs, tag = 'smem constant byte address 0x4 - core index']
  #allocation1 [shape = 'u32[72,128]{1,0:T(1,128)}', space=vmem, size = 0x9000, scoped, tag = 'internal scratch']
  %s0 = inlined_call_operand.vmem [shape: f32[300,84], index: 0, kind: input, shape index: {}]
  %s1 = inlined_call_operand.vmem [shape: bf16[84,16], index: 1, kind: input, shape index: {}]
  %s2 = inlined_call_operand.vmem [shape: bf16[16,128], index: 2, kind: input, shape index: {}]
  %s3 = inlined_call_operand.vmem [shape: bf16[128,128], index: 3, kind: input, shape index: {}]
  %s4 = inlined_call_operand.vmem [shape: f32[8,128], index: 4, kind: input, shape index: {}]
  %s5 = inlined_call_operand.vmem [shape: f32[300,1], index: 5, kind: output, shape index: {}]
  %s6 = sld [smem:[#allocation0]]
  $region101: #{_lambda_.1} parent=0
    _
  %s8 = ssub.s32 1, %s6
  %s9 = scalar_select 0, %s8, %s6
  $region1: #{_lambda_.1} parent=0
    #allocation2 [shape = 'u8[40960]{0}', space=vmem, size = 0xa000, scoped, tag = 'output window, operand 0']
    loop: start=0, step=1, limit=10
    $region2: #{_lambda_.1} parent=1 // loop_pre_header
      _
    $region3: #{_lambda_.1} parent=1 // loop_header
      %s11 = sphi 0, %s15
      %p12 = scmp.ge.s32.totalorder %s11, 10
      %s21 = sphi 0, %s23
      %s24 = sphi 0, %s21
      %s25 = sphi 0, %s24
      %s41 = sphi 0, %s25
      %s45 = sphi 0, %s45
      %s47 = sphi 0, %s45
      %s48 = sphi 0, %s47
      %s62 = sphi 0, %s48
      %s66 = sphi 0, %s66
      %s68 = sphi 0, %s66
      %s69 = sphi 0, %s68
      %s83 = sphi 0, %s69
      %s87 = sphi 0, %s87
      %s89 = sphi 0, %s87
      %s90 = sphi 0, %s89
      %s104 = sphi 0, %s90
      %s108 = sphi 0, %s108
      %s110 = sphi 0, %s108
      %s111 = sphi 0, %s110
      %s125 = sphi 0, %s111
      %s131 = sphi 0, %s133
      %s134 = sphi 0, %s131
      %s135 = sphi 0, %s134
      %s151 = sphi 0, %s135
    $region4: #{_lambda_.1} parent=1 // loop_header_branch
      %14 = sbr.rel (%p12) target = $region8
    $region5: #{_lambda_.1} parent=1 // loop_body
      %s16 = ssub.s32 %s11, 1
      %s17 = ssub.s32 %s11, 2
      %s18 = sadd.s32 %s11, 1
      %s19 = ssub.s32 %s11, %s18
      %p20 = scmp.eq.s32.totalorder %s19, 0
      %s22 = sadd.s32 %s21, 1
      %s23 = scalar_select %p20, %s21, %s22
      %p26 = pneg %p20
      %p27 = scmp.eq.s32.totalorder %s11, 7
      %p28 = por %p26, %p27
      %p29 = scmp.ne.s32.totalorder %s21, %s24
      %p30 = scmp.eq.s32.totalorder %s11, 0
      %p31 = por %p29, %p30
      %p32 = scmp.ne.s32.totalorder %s21, %s24
      %p33 = scmp.eq.s32.totalorder %s16, 7
      %p34 = por %p32, %p33
      %p35 = scmp.ne.s32.totalorder %s24, %s25
      %p36 = scmp.eq.s32.totalorder %s16, 0
      %p37 = por %p35, %p36
      %p38 = scmp.ne.s32.totalorder %s24, %s25
      %p39 = scmp.eq.s32.totalorder %s17, 7
      %p40 = por %p38, %p39
      %p42 = scmp.ne.s32.totalorder %s25, %s41
      %p43 = scmp.eq.s32.totalorder %s17, 0
      %p44 = por %p42, %p43
      %s46 = sadd.s32 %s45, 1
      %p49 = scmp.eq.s32.totalorder %s11, 7
      %p50 = scmp.ne.s32.totalorder %s45, %s47
      %p51 = scmp.eq.s32.totalorder %s11, 0
      %p52 = por %p50, %p51
      %p53 = scmp.ne.s32.totalorder %s45, %s47
      %p54 = scmp.eq.s32.totalorder %s16, 7
      %p55 = por %p53, %p54
      %p56 = scmp.ne.s32.totalorder %s47, %s48
      %p57 = scmp.eq.s32.totalorder %s16, 0
      %p58 = por %p56, %p57
      %p59 = scmp.ne.s32.totalorder %s47, %s48
      %p60 = scmp.eq.s32.totalorder %s17, 7
      %p61 = por %p59, %p60
      %p63 = scmp.ne.s32.totalorder %s48, %s62
      %p64 = scmp.eq.s32.totalorder %s17, 0
      %p65 = por %p63, %p64
      %s67 = sadd.s32 %s66, 1
      %p70 = scmp.eq.s32.totalorder %s11, 7
      %p71 = scmp.ne.s32.totalorder %s66, %s68
      %p72 = scmp.eq.s32.totalorder %s11, 0
      %p73 = por %p71, %p72
      %p74 = scmp.ne.s32.totalorder %s66, %s68
      %p75 = scmp.eq.s32.totalorder %s16, 7
      %p76 = por %p74, %p75
      %p77 = scmp.ne.s32.totalorder %s68, %s69
      %p78 = scmp.eq.s32.totalorder %s16, 0
      %p79 = por %p77, %p78
      %p80 = scmp.ne.s32.totalorder %s68, %s69
      %p81 = scmp.eq.s32.totalorder %s17, 7
      %p82 = por %p80, %p81
      %p84 = scmp.ne.s32.totalorder %s69, %s83
      %p85 = scmp.eq.s32.totalorder %s17, 0
      %p86 = por %p84, %p85
      %s88 = sadd.s32 %s87, 1
      %p91 = scmp.eq.s32.totalorder %s11, 7
      %p92 = scmp.ne.s32.totalorder %s87, %s89
      %p93 = scmp.eq.s32.totalorder %s11, 0
      %p94 = por %p92, %p93
      %p95 = scmp.ne.s32.totalorder %s87, %s89
      %p96 = scmp.eq.s32.totalorder %s16, 7
      %p97 = por %p95, %p96
      %p98 = scmp.ne.s32.totalorder %s89, %s90
      %p99 = scmp.eq.s32.totalorder %s16, 0
      %p100 = por %p98, %p99
      %p101 = scmp.ne.s32.totalorder %s89, %s90
      %p102 = scmp.eq.s32.totalorder %s17, 7
      %p103 = por %p101, %p102
      %p105 = scmp.ne.s32.totalorder %s90, %s104
      %p106 = scmp.eq.s32.totalorder %s17, 0
      %p107 = por %p105, %p106
      %s109 = sadd.s32 %s108, 1
      %p112 = scmp.eq.s32.totalorder %s11, 7
      %p113 = scmp.ne.s32.totalorder %s108, %s110
      %p114 = scmp.eq.s32.totalorder %s11, 0
      %p115 = por %p113, %p114
      %p116 = scmp.ne.s32.totalorder %s108, %s110
      %p117 = scmp.eq.s32.totalorder %s16, 7
      %p118 = por %p116, %p117
      %p119 = scmp.ne.s32.totalorder %s110, %s111
      %p120 = scmp.eq.s32.totalorder %s16, 0
      %p121 = por %p119, %p120
      %p122 = scmp.ne.s32.totalorder %s110, %s111
      %p123 = scmp.eq.s32.totalorder %s17, 7
      %p124 = por %p122, %p123
      %p126 = scmp.ne.s32.totalorder %s111, %s125
      %p127 = scmp.eq.s32.totalorder %s17, 0
      %p128 = por %p126, %p127
      %s129 = ssub.s32 %s11, %s18
      %p130 = scmp.eq.s32.totalorder %s129, 0
      %s132 = sadd.s32 %s131, 1
      %s133 = scalar_select %p130, %s131, %s132
      %p136 = pneg %p130
      %p137 = scmp.eq.s32.totalorder %s11, 7
      %p138 = por %p136, %p137
      %p139 = scmp.ne.s32.totalorder %s131, %s134
      %p140 = scmp.eq.s32.totalorder %s11, 0
      %p141 = por %p139, %p140
      %p142 = scmp.ne.s32.totalorder %s131, %s134
      %p143 = scmp.eq.s32.totalorder %s16, 7
      %p144 = por %p142, %p143
      %p145 = scmp.ne.s32.totalorder %s134, %s135
      %p146 = scmp.eq.s32.totalorder %s16, 0
      %p147 = por %p145, %p146
      %p148 = scmp.ne.s32.totalorder %s134, %s135
      %p149 = scmp.eq.s32.totalorder %s17, 7
      %p150 = por %p148, %p149
      %p152 = scmp.ne.s32.totalorder %s135, %s151
      %p153 = scmp.eq.s32.totalorder %s17, 0
      %p154 = por %p152, %p153
      %p155 = scmp.le.s32.totalorder 1, %s11
      %p156 = scmp.lt.s32.totalorder %s11, 9
      %p157 = pnand %p155, %p156
      %p158 = pneg %p157
      // Predicated region
      $region9: #{_lambda_.1} parent=5 // pred_check
        _
      $region10: #{_lambda_.1} parent=5 // pred_check_branch
        %160 = sbr.rel (%p157) target = $region12
      $region11: #{_lambda_.1} parent=5 // pred_region
        %s161 = ssub.s32 %s11, 1
        // Predicated region
        $region13: #{_lambda_.1} parent=11 // pred_check
          %p162 = pneg %p58
        $region14: #{_lambda_.1} parent=11 // pred_check_branch
          %164 = sbr.rel (%p162) target = $region16
        $region15: #{_lambda_.1} parent=11 // pred_region
          _
        $region16: #{_lambda_.1} parent=11 // pred_fallthru
          _
        // Predicated region
        $region17: #{_lambda_.1} parent=11 // pred_check
          %p165 = pneg %p79
        $region18: #{_lambda_.1} parent=11 // pred_check_branch
          %167 = sbr.rel (%p165) target = $region20
        $region19: #{_lambda_.1} parent=11 // pred_region
          _
        $region20: #{_lambda_.1} parent=11 // pred_fallthru
          _
        // Predicated region
        $region21: #{_lambda_.1} parent=11 // pred_check
          %p168 = pneg %p100
        $region22: #{_lambda_.1} parent=11 // pred_check_branch
          %170 = sbr.rel (%p168) target = $region24
        $region23: #{_lambda_.1} parent=11 // pred_region
          _
        $region24: #{_lambda_.1} parent=11 // pred_fallthru
          _
        // Predicated region
        $region25: #{_lambda_.1} parent=11 // pred_check
          %p171 = pneg %p121
        $region26: #{_lambda_.1} parent=11 // pred_check_branch
          %173 = sbr.rel (%p171) target = $region28
        $region27: #{_lambda_.1} parent=11 // pred_region
          _
        $region28: #{_lambda_.1} parent=11 // pred_fallthru
          _
      $region12: #{_lambda_.1} parent=5 // pred_fallthru
        _
      %p174 = scmp.lt.s32.totalorder %s11, 8
      // Predicated region
      $region29: #{_lambda_.1} parent=5 // pred_check
        %p175 = pneg %p174
      $region30: #{_lambda_.1} parent=5 // pred_check_branch
        %177 = sbr.rel (%p175) target = $region32
      $region31: #{_lambda_.1} parent=5 // pred_region
        // Predicated region
        $region33: #{_lambda_.1} parent=31 // pred_check
          %p178 = pneg %p31
        $region34: #{_lambda_.1} parent=31 // pred_check_branch
          %180 = sbr.rel (%p178) target = $region36
        $region35: #{_lambda_.1} parent=31 // pred_region
          %s181 = smul.u32 5, %s11
          %s182 = ssub.s32 38, %s181
          %p183 = scmp.lt.s32.totalorder %s182, 5
          %s184 = scalar_select %p183, %s182, 5
          %s185 = smul.u32 8, %s184
          %p186 = scmp.lt.s32.totalorder %s181, 37
          %s187 = scalar_select %p186, %s181, 37
          %s188 = smul.addr %s187, 8
          %s189 = scalar_lea.vmem %s0, %s188
          %s190 = smul.u32 5, %s11
          %s191 = ssub.s32 38, %s190
          %p192 = scmp.lt.s32.totalorder %s191, 5
          %s193 = scalar_select %p192, %s191, 5
          %s194 = smul.u32 8, %s193
        $region36: #{_lambda_.1} parent=31 // pred_fallthru
          _
      $region32: #{_lambda_.1} parent=5 // pred_fallthru
        _
      %p195 = scmp.le.s32.totalorder 1, %s11
      %p196 = scmp.lt.s32.totalorder %s11, 9
      %p197 = pnand %p195, %p196
      %p198 = pneg %p197
      // Predicated region
      $region37: #{_lambda_.1} parent=5 // pred_check
        _
      $region38: #{_lambda_.1} parent=5 // pred_check_branch
        %200 = sbr.rel (%p197) target = $region40
      $region39: #{_lambda_.1} parent=5 // pred_region
        %s201 = ssub.s32 %s11, 1
        %s202 = smul.u32 5, %s16
        %s203 = ssub.s32 38, %s202
        %p204 = scmp.lt.s32.totalorder %s203, 5
        %s205 = scalar_select %p204, %s203, 5
        %s206 = smul.u32 8, %s205
        %p207 = scmp.lt.s32.totalorder %s202, 37
        %s208 = scalar_select %p207, %s202, 37
        %s209 = smul.addr %s208, 8
        %s210 = scalar_lea.vmem %s0, %s209
        %p211 = pneg %p37
        %p212 = pneg %p34
        %p213 = pneg %p58
        %p214 = pneg %p55
        %p215 = pneg %p79
        %p216 = pneg %p76
        %p217 = pneg %p100
        %p218 = pneg %p97
        %p219 = pneg %p121
        %p220 = pneg %p118
        %p221 = pneg %p147
        %p222 = pneg %p144
        %s223 = sand.u32 %s134, 1
        %s224 = sand.u32 %s134, 1
        %s225 = smul.addr %s224, 40
        %s226 = scalar_lea.vmem [#allocation2], %s225
        %s227 = smul.u32 5, %s16
        %s228 = ssub.s32 38, %s227
        %p229 = scmp.lt.s32.totalorder %s228, 5
        %s230 = scalar_select %p229, %s228, 5
        %s231 = smul.u32 8, %s230
        %p232 = scmp.lt.s32.totalorder %s227, 37
        %s233 = scalar_select %p232, %s227, 37
        %s234 = smul.addr %s233, 8
        %s235 = scalar_lea.vmem %s0, %s234
        %s236 = smul.u32 5, %s16
        %s237 = ssub.s32 38, %s236
        %p238 = scmp.lt.s32.totalorder %s237, 5
        %s239 = scalar_select %p238, %s237, 5
        %s240 = smul.u32 8, %s239
        %s241 = smul.u32 5, %s16
        %s242 = ssub.s32 38, %s241
        %p243 = scmp.lt.s32.totalorder %s242, 5
        %s244 = scalar_select %p243, %s242, 5
        %s245 = smul.u32 8, %s244
        %v247 = vld [vmem:[%s235] sm:$0xff]
        %v248 = vld [vmem:[%s235 + $0x8] sm:$0xff]
        %v249 = vld [vmem:[%s235 + $0x10] sm:$0xff]
        %v250 = vld [vmem:[%s235 + $0x18] sm:$0xff]
        %v251 = vld [vmem:[%s235 + $0x20] sm:$0xff]
        %v252 = vld [vmem:[%s4] sm:$0x1]
        %v253 = vld [vmem:[%s4 + $0x1] sm:$0x1]
        %v254 = vld [vmem:[%s4 + $0x2] sm:$0x1]
        %v255 = vld [vmem:[%s4 + $0x3] sm:$0x1]
        %v256 = vld [vmem:[%s4 + $0x4] sm:$0x1]
        %v257 = vpack.c.bf16 %v248, %v247
        %v258 = vpack.c.bf16 %v250, %v249
        %v259 = vpack.c.bf16 %v251, %v251
        %v260 = vld [vmem:[%s1] sm:$0xf]
        %v261 = vld [vmem:[%s1 + $0x4] sm:$0xf]
        %v262 = vld [vmem:[%s1 + $0x8] sm:$0xf]
        %v263 = vld [vmem:[%s1 + $0xc] sm:$0xf]
        %v264 = vld [vmem:[%s1 + $0x10] sm:$0xf]
        %v265 = vld [vmem:[%s1 + $0x14] sm:$0xf]
        %v266 = vld [vmem:[%s1 + $0x18] sm:$0xf]
        %v267 = vld [vmem:[%s1 + $0x1c] sm:$0xf]
        %v268 = vld [vmem:[%s1 + $0x20] sm:$0xf]
        %v269 = vld [vmem:[%s1 + $0x24] sm:$0xf]
        %v270 = vld [vmem:[%s1 + $0x28] sm:$0x3]
        %v271 = vperm.slane %v252, 0
        %v283 = vunpack.c.l.b16 %v260
        %v284 = vunpack.c.l.b16 %v261
        %v285 = vunpack.c.l.b16 %v262
        %v286 = vunpack.c.l.b16 %v263
        %v287 = vunpack.c.l.b16 %v264
        %v288 = vunpack.c.l.b16 %v265
        %v289 = vunpack.c.l.b16 %v266
        %v290 = vunpack.c.l.b16 %v267
        %v291 = vunpack.c.l.b16 %v268
        %v292 = vunpack.c.l.b16 %v269
        %v293 = vunpack.c.l.b16 %v270
        %v294 = vpack.c.b16 %v284, %v283
        %v295 = vpack.c.b16 %v286, %v285
        %v296 = vpack.c.b16 %v288, %v287
        %v297 = vpack.c.b16 %v290, %v289
        %v298 = vpack.c.b16 %v292, %v291
        %v299 = vpack.c.b16 %v293, %v293
        %vm305 = vcmask 687104
        %v307 = vsel %vm305, %v257, 0
        %v310 = vsel %vm305, %v258, 0
        %v313 = vsel %vm305, %v259, 0
        %vm315 = vcmask 1041408
        %v317 = vsel %vm315, %v299, 0
        %319 = vmatpush.bf16.msra.mxu0 0
        %320 = vmatpush.bf16.msra.mxu0 0
        %321 = vmatpush.bf16.msra.mxu0 %v317
        %322 = vmatpush.bf16.msra.mxu0 %v298
        %323 = vmatpush.bf16.msra.mxu0 %v297
        %324 = vmatpush.bf16.msra.mxu0 %v296
        %325 = vmatpush.bf16.msra.mxu0 %v295
        %326 = vmatpush.bf16.msra.mxu0 %v294
        %327 = vmatmul.bf16.gmra.mxu0 %v307
        %v328 = vpop.f32.mrf.mxu0
        %v329 = vadd.f32 %v271, %v328
        %v330 = vpop.f32.mrf.mxu0
        %v331 = vadd.f32 %v271, %v330
        %332 = vmatmul.bf16.gmra.mxu0 %v310
        %v333 = vpop.f32.mrf.mxu0
        %v334 = vadd.f32 %v271, %v333
        %v335 = vpop.f32.mrf.mxu0
        %v336 = vadd.f32 %v271, %v335
        %337 = vmatmul.bf16.gmra.mxu0 %v313
        %v338 = vpop.f32.mrf.mxu0
        %v339 = vadd.f32 %v271, %v338
        %v340 = vpop.f32.mrf.mxu0
        %341 = vdwg.mxu0
        %v342 = vmul.f32 %v329, 1.442695
        %v343 = vpow.pop %v342
        %v344 = vmul.f32 %v331, 1.442695
        %v345 = vpow.pop %v344
        %v346 = vmul.f32 %v334, 1.442695
        %v347 = vpow.pop %v346
        %v348 = vmul.f32 %v336, 1.442695
        %v349 = vpow.pop %v348
        %v350 = vmul.f32 %v339, 1.442695
        %v351 = vpow.pop %v350
        %v352 = vadd.f32 %v343, 2.0
        %v353 = vadd.f32 %v345, 2.0
        %v354 = vadd.f32 %v347, 2.0
        %v355 = vadd.f32 %v349, 2.0
        %v356 = vadd.f32 %v351, 2.0
        %v357 = vmul.f32 %v343, %v352
        %v358 = vmul.f32 %v345, %v353
        %v359 = vmul.f32 %v347, %v354
        %v360 = vmul.f32 %v349, %v355
        %v361 = vmul.f32 %v351, %v356
        %v362 = vadd.f32 %v357, 2.0
        %v363 = vadd.f32 %v358, 2.0
        %v364 = vadd.f32 %v359, 2.0
        %v365 = vadd.f32 %v360, 2.0
        %v366 = vadd.f32 %v361, 2.0
        %v367 = vrcp.pop %v362
        %v368 = vrcp.pop %v363
        %v369 = vrcp.pop %v364
        %v370 = vrcp.pop %v365
        %v371 = vrcp.pop %v366
        %v372 = vmul.f32 %v357, %v367
        %v373 = vmul.f32 %v358, %v368
        %v374 = vmul.f32 %v359, %v369
        %v375 = vmul.f32 %v360, %v370
        %v376 = vmul.f32 %v361, %v371
        %v377 = vmul.f32 %v329, %v372
        %v378 = vmul.f32 %v331, %v373
        %v379 = vmul.f32 %v334, %v374
        %v380 = vmul.f32 %v336, %v375
        %v381 = vmul.f32 %v339, %v376
        %vm382 = vcmp.gt.f32.partialorder %v329, 20.0
        %vm383 = vcmp.gt.f32.partialorder %v331, 20.0
        %vm384 = vcmp.gt.f32.partialorder %v334, 20.0
        %vm385 = vcmp.gt.f32.partialorder %v336, 20.0
        %vm386 = vcmp.gt.f32.partialorder %v339, 20.0
        %v387 = vsel %vm382, %v329, %v377
        %v388 = vsel %vm383, %v331, %v378
        %v389 = vsel %vm384, %v334, %v379
        %v390 = vsel %vm385, %v336, %v380
        %v391 = vsel %vm386, %v339, %v381
        %v392 = vpack.c.bf16 %v388, %v387
        %v393 = vpack.c.bf16 %v390, %v389
        %v394 = vpack.c.bf16 %v391, %v391
        %v395 = vld [vmem:[%s2] sm:$0xf]
        %v396 = vld [vmem:[%s2 + $0x4] sm:$0xf]
        %v397 = vperm.slane %v253, 0
        %v400 = vunpack.c.l.b16 %v395
        %v401 = vunpack.c.l.b16 %v396
        %v402 = vpack.c.b16 %v401, %v400
        %vm404 = vcmask 130048
        %v406 = vsel %vm404, %v392, 0
        %v409 = vsel %vm404, %v393, 0
        %v412 = vsel %vm404, %v394, 0
        %414 = vmatpush.bf16.msra.mxu0 0
        %415 = vmatpush.bf16.msra.mxu0 0
        %416 = vmatpush.bf16.msra.mxu0 0
        %417 = vmatpush.bf16.msra.mxu0 0
        %418 = vmatpush.bf16.msra.mxu0 0
        %419 = vmatpush.bf16.msra.mxu0 0
        %420 = vmatpush.bf16.msra.mxu0 0
        %421 = vmatpush.bf16.msra.mxu0 %v402
        %422 = vmatmul.bf16.gmra.mxu0 %v406
        %v423 = vpop.f32.mrf.mxu0
        %v424 = vadd.f32 %v397, %v423
        %v425 = vpop.f32.mrf.mxu0
        %v426 = vadd.f32 %v397, %v425
        %427 = vmatmul.bf16.gmra.mxu0 %v409
        %v428 = vpop.f32.mrf.mxu0
        %v429 = vadd.f32 %v397, %v428
        %v430 = vpop.f32.mrf.mxu0
        %v431 = vadd.f32 %v397, %v430
        %432 = vmatmul.bf16.gmra.mxu0 %v412
        %v433 = vpop.f32.mrf.mxu0
        %v434 = vadd.f32 %v397, %v433
        %v435 = vpop.f32.mrf.mxu0
        %436 = vdwg.mxu0
        %v437 = vmul.f32 %v424, 1.442695
        %v438 = vpow.pop %v437
        %v439 = vmul.f32 %v426, 1.442695
        %v440 = vpow.pop %v439
        %v441 = vmul.f32 %v429, 1.442695
        %v442 = vpow.pop %v441
        %v443 = vmul.f32 %v431, 1.442695
        %v444 = vpow.pop %v443
        %v445 = vmul.f32 %v434, 1.442695
        %v446 = vpow.pop %v445
        %v447 = vadd.f32 %v438, 2.0
        %v448 = vadd.f32 %v440, 2.0
        %v449 = vadd.f32 %v442, 2.0
        %v450 = vadd.f32 %v444, 2.0
        %v451 = vadd.f32 %v446, 2.0
        %v452 = vmul.f32 %v438, %v447
        %v453 = vmul.f32 %v440, %v448
        %v454 = vmul.f32 %v442, %v449
        %v455 = vmul.f32 %v444, %v450
        %v456 = vmul.f32 %v446, %v451
        %v457 = vadd.f32 %v452, 2.0
        %v458 = vadd.f32 %v453, 2.0
        %v459 = vadd.f32 %v454, 2.0
        %v460 = vadd.f32 %v455, 2.0
        %v461 = vadd.f32 %v456, 2.0
        %v462 = vrcp.pop %v457
        %v463 = vrcp.pop %v458
        %v464 = vrcp.pop %v459
        %v465 = vrcp.pop %v460
        %v466 = vrcp.pop %v461
        %v467 = vmul.f32 %v452, %v462
        %v468 = vmul.f32 %v453, %v463
        %v469 = vmul.f32 %v454, %v464
        %v470 = vmul.f32 %v455, %v465
        %v471 = vmul.f32 %v456, %v466
        %v472 = vmul.f32 %v424, %v467
        %v473 = vmul.f32 %v426, %v468
        %v474 = vmul.f32 %v429, %v469
        %v475 = vmul.f32 %v431, %v470
        %v476 = vmul.f32 %v434, %v471
        %vm477 = vcmp.gt.f32.partialorder %v424, 20.0
        %vm478 = vcmp.gt.f32.partialorder %v426, 20.0
        %vm479 = vcmp.gt.f32.partialorder %v429, 20.0
        %vm480 = vcmp.gt.f32.partialorder %v431, 20.0
        %vm481 = vcmp.gt.f32.partialorder %v434, 20.0
        %v482 = vsel %vm477, %v424, %v472
        %v483 = vsel %vm478, %v426, %v473
        %v484 = vsel %vm479, %v429, %v474
        %v485 = vsel %vm480, %v431, %v475
        %v486 = vsel %vm481, %v434, %v476
        %487 = vrot.lane.b32.xlu0 %v482, 1
        %v488 = vpop.permute.xlu0 %487
        %489 = vrot.lane.b32.xlu0 %v483, 1
        %v490 = vpop.permute.xlu0 %489
        %491 = vrot.lane.b32.xlu0 %v484, 1
        %v492 = vpop.permute.xlu0 %491
        %493 = vrot.lane.b32.xlu0 %v485, 1
        %v494 = vpop.permute.xlu0 %493
        %495 = vrot.lane.b32.xlu0 %v486, 1
        %v496 = vpop.permute.xlu0 %495
        %497 = vrot.lane.b32.xlu0 %v482, 127
        %v498 = vpop.permute.xlu0 %497
        %499 = vrot.lane.b32.xlu0 %v483, 127
        %v500 = vpop.permute.xlu0 %499
        %501 = vrot.lane.b32.xlu0 %v484, 127
        %v502 = vpop.permute.xlu0 %501
        %503 = vrot.lane.b32.xlu0 %v485, 127
        %v504 = vpop.permute.xlu0 %503
        %505 = vrot.lane.b32.xlu0 %v486, 127
        %v506 = vpop.permute.xlu0 %505
        %v507 = vmax.f32 %v488, %v498
        %v508 = vmax.f32 %v490, %v500
        %v509 = vmax.f32 %v492, %v502
        %v510 = vmax.f32 %v494, %v504
        %v511 = vmax.f32 %v496, %v506
        %v512 = vmax.f32 %v482, %v507
        %v513 = vmax.f32 %v483, %v508
        %v514 = vmax.f32 %v484, %v509
        %v515 = vmax.f32 %v485, %v510
        %v516 = vmax.f32 %v486, %v511
        %v517 = vpack.c.bf16 %v513, %v512
        %v518 = vpack.c.bf16 %v515, %v514
        %v519 = vpack.c.bf16 %v516, %v516
        %v520 = vld [vmem:[%s3] sm:$0xf]
        %v521 = vld [vmem:[%s3 + $0x4] sm:$0xf]
        %v522 = vld [vmem:[%s3 + $0x8] sm:$0xf]
        %v523 = vld [vmem:[%s3 + $0xc] sm:$0xf]
        %v524 = vld [vmem:[%s3 + $0x10] sm:$0xf]
        %v525 = vld [vmem:[%s3 + $0x14] sm:$0xf]
        %v526 = vld [vmem:[%s3 + $0x18] sm:$0xf]
        %v527 = vld [vmem:[%s3 + $0x1c] sm:$0xf]
        %v528 = vld [vmem:[%s3 + $0x20] sm:$0xf]
        %v529 = vld [vmem:[%s3 + $0x24] sm:$0xf]
        %v530 = vld [vmem:[%s3 + $0x28] sm:$0xf]
        %v531 = vld [vmem:[%s3 + $0x2c] sm:$0xf]
        %v532 = vld [vmem:[%s3 + $0x30] sm:$0xf]
        %v533 = vld [vmem:[%s3 + $0x34] sm:$0xf]
        %v534 = vld [vmem:[%s3 + $0x38] sm:$0xf]
        %v535 = vld [vmem:[%s3 + $0x3c] sm:$0xf]
        %v536 = vperm.slane %v254, 0
        %v553 = vunpack.c.l.b16 %v520
        %v554 = vunpack.c.l.b16 %v521
        %v555 = vunpack.c.l.b16 %v522
        %v556 = vunpack.c.l.b16 %v523
        %v557 = vunpack.c.l.b16 %v524
        %v558 = vunpack.c.l.b16 %v525
        %v559 = vunpack.c.l.b16 %v526
        %v560 = vunpack.c.l.b16 %v527
        %v561 = vunpack.c.l.b16 %v528
        %v562 = vunpack.c.l.b16 %v529
        %v563 = vunpack.c.l.b16 %v530
        %v564 = vunpack.c.l.b16 %v531
        %v565 = vunpack.c.l.b16 %v532
        %v566 = vunpack.c.l.b16 %v533
        %v567 = vunpack.c.l.b16 %v534
        %v568 = vunpack.c.l.b16 %v535
        %v569 = vpack.c.b16 %v554, %v553
        %v570 = vpack.c.b16 %v556, %v555
        %v571 = vpack.c.b16 %v558, %v557
        %v572 = vpack.c.b16 %v560, %v559
        %v573 = vpack.c.b16 %v562, %v561
        %v574 = vpack.c.b16 %v564, %v563
        %v575 = vpack.c.b16 %v566, %v565
        %v576 = vpack.c.b16 %v568, %v567
        %585 = vmatpush.bf16.msra.mxu0 %v576
        %586 = vmatpush.bf16.msra.mxu0 %v575
        %587 = vmatpush.bf16.msra.mxu0 %v574
        %588 = vmatpush.bf16.msra.mxu0 %v573
        %589 = vmatpush.bf16.msra.mxu0 %v572
        %590 = vmatpush.bf16.msra.mxu0 %v571
        %591 = vmatpush.bf16.msra.mxu0 %v570
        %592 = vmatpush.bf16.msra.mxu0 %v569
        %593 = vmatmul.bf16.gmra.mxu0 %v517
        %v594 = vpop.f32.mrf.mxu0
        %v595 = vadd.f32 %v536, %v594
        %v596 = vpop.f32.mrf.mxu0
        %v597 = vadd.f32 %v536, %v596
        %598 = vmatmul.bf16.gmra.mxu0 %v518
        %v599 = vpop.f32.mrf.mxu0
        %v600 = vadd.f32 %v536, %v599
        %v601 = vpop.f32.mrf.mxu0
        %v602 = vadd.f32 %v536, %v601
        %603 = vmatmul.bf16.gmra.mxu0 %v519
        %v604 = vpop.f32.mrf.mxu0
        %v605 = vadd.f32 %v536, %v604
        %v606 = vpop.f32.mrf.mxu0
        %607 = vdwg.mxu0
        %v608 = vmul.f32 %v595, 1.442695
        %v609 = vpow.pop %v608
        %v610 = vmul.f32 %v597, 1.442695
        %v611 = vpow.pop %v610
        %v612 = vmul.f32 %v600, 1.442695
        %v613 = vpow.pop %v612
        %v614 = vmul.f32 %v602, 1.442695
        %v615 = vpow.pop %v614
        %v616 = vmul.f32 %v605, 1.442695
        %v617 = vpow.pop %v616
        %v618 = vadd.f32 %v609, 2.0
        %v619 = vadd.f32 %v611, 2.0
        %v620 = vadd.f32 %v613, 2.0
        %v621 = vadd.f32 %v615, 2.0
        %v622 = vadd.f32 %v617, 2.0
        %v623 = vmul.f32 %v609, %v618
        %v624 = vmul.f32 %v611, %v619
        %v625 = vmul.f32 %v613, %v620
        %v626 = vmul.f32 %v615, %v621
        %v627 = vmul.f32 %v617, %v622
        %v628 = vadd.f32 %v623, 2.0
        %v629 = vadd.f32 %v624, 2.0
        %v630 = vadd.f32 %v625, 2.0
        %v631 = vadd.f32 %v626, 2.0
        %v632 = vadd.f32 %v627, 2.0
        %v633 = vrcp.pop %v628
        %v634 = vrcp.pop %v629
        %v635 = vrcp.pop %v630
        %v636 = vrcp.pop %v631
        %v637 = vrcp.pop %v632
        %v638 = vmul.f32 %v623, %v633
        %v639 = vmul.f32 %v624, %v634
        %v640 = vmul.f32 %v625, %v635
        %v641 = vmul.f32 %v626, %v636
        %v642 = vmul.f32 %v627, %v637
        %v643 = vmul.f32 %v595, %v638
        %v644 = vmul.f32 %v597, %v639
        %v645 = vmul.f32 %v600, %v640
        %v646 = vmul.f32 %v602, %v641
        %v647 = vmul.f32 %v605, %v642
        %vm648 = vcmp.gt.f32.partialorder %v595, 20.0
        %vm649 = vcmp.gt.f32.partialorder %v597, 20.0
        %vm650 = vcmp.gt.f32.partialorder %v600, 20.0
        %vm651 = vcmp.gt.f32.partialorder %v602, 20.0
        %vm652 = vcmp.gt.f32.partialorder %v605, 20.0
        %v653 = vsel %vm648, %v595, %v643
        %v654 = vsel %vm649, %v597, %v644
        %v655 = vsel %vm650, %v600, %v645
        %v656 = vsel %vm651, %v602, %v646
        %v657 = vsel %vm652, %v605, %v647
        %658 = vrot.lane.b32.xlu0 %v653, 1
        %v659 = vpop.permute.xlu0 %658
        %660 = vrot.lane.b32.xlu0 %v654, 1
        %v661 = vpop.permute.xlu0 %660
        %662 = vrot.lane.b32.xlu0 %v655, 1
        %v663 = vpop.permute.xlu0 %662
        %664 = vrot.lane.b32.xlu0 %v656, 1
        %v665 = vpop.permute.xlu0 %664
        %666 = vrot.lane.b32.xlu0 %v657, 1
        %v667 = vpop.permute.xlu0 %666
        %668 = vrot.lane.b32.xlu0 %v653, 127
        %v669 = vpop.permute.xlu0 %668
        %670 = vrot.lane.b32.xlu0 %v654, 127
        %v671 = vpop.permute.xlu0 %670
        %672 = vrot.lane.b32.xlu0 %v655, 127
        %v673 = vpop.permute.xlu0 %672
        %674 = vrot.lane.b32.xlu0 %v656, 127
        %v675 = vpop.permute.xlu0 %674
        %676 = vrot.lane.b32.xlu0 %v657, 127
        %v677 = vpop.permute.xlu0 %676
        %v678 = vmax.f32 %v659, %v669
        %v679 = vmax.f32 %v661, %v671
        %v680 = vmax.f32 %v663, %v673
        %v681 = vmax.f32 %v665, %v675
        %v682 = vmax.f32 %v667, %v677
        %v683 = vmax.f32 %v653, %v678
        %v684 = vmax.f32 %v654, %v679
        %v685 = vmax.f32 %v655, %v680
        %v686 = vmax.f32 %v656, %v681
        %v687 = vmax.f32 %v657, %v682
        %688 = vrot.lane.b32.xlu0 %v653, 2
        %v689 = vpop.permute.xlu0 %688
        %690 = vrot.lane.b32.xlu0 %v654, 2
        %v691 = vpop.permute.xlu0 %690
        %692 = vrot.lane.b32.xlu0 %v655, 2
        %v693 = vpop.permute.xlu0 %692
        %694 = vrot.lane.b32.xlu0 %v656, 2
        %v695 = vpop.permute.xlu0 %694
        %696 = vrot.lane.b32.xlu0 %v657, 2
        %v697 = vpop.permute.xlu0 %696
        %698 = vrot.lane.b32.xlu0 %v653, 126
        %v699 = vpop.permute.xlu0 %698
        %700 = vrot.lane.b32.xlu0 %v654, 126
        %v701 = vpop.permute.xlu0 %700
        %702 = vrot.lane.b32.xlu0 %v655, 126
        %v703 = vpop.permute.xlu0 %702
        %704 = vrot.lane.b32.xlu0 %v656, 126
        %v705 = vpop.permute.xlu0 %704
        %706 = vrot.lane.b32.xlu0 %v657, 126
        %v707 = vpop.permute.xlu0 %706
        %v708 = vmax.f32 %v689, %v699
        %v709 = vmax.f32 %v691, %v701
        %v710 = vmax.f32 %v693, %v703
        %v711 = vmax.f32 %v695, %v705
        %v712 = vmax.f32 %v697, %v707
        %v713 = vmax.f32 %v683, %v708
        %v714 = vmax.f32 %v684, %v709
        %v715 = vmax.f32 %v685, %v710
        %v716 = vmax.f32 %v686, %v711
        %v717 = vmax.f32 %v687, %v712
        %v718 = vperm.slane %v255, 0
        %v719 = vmul.f32 %v713, %v718
        %v720 = vmul.f32 %v714, %v718
        %v721 = vmul.f32 %v715, %v718
        %v722 = vmul.f32 %v716, %v718
        %v723 = vmul.f32 %v717, %v718
        %724 = vadd.xlane.f32.xlu0 %v719
        %v725 = vpop.xlane.xlu0 %724
        %726 = vadd.xlane.f32.xlu0 %v720
        %v727 = vpop.xlane.xlu0 %726
        %728 = vadd.xlane.f32.xlu0 %v721
        %v729 = vpop.xlane.xlu0 %728
        %730 = vadd.xlane.f32.xlu0 %v722
        %v731 = vpop.xlane.xlu0 %730
        %732 = vadd.xlane.f32.xlu0 %v723
        %v733 = vpop.xlane.xlu0 %732
        %v734 = vperm.slane %v256, 0
        %v735 = vadd.f32 %v725, %v734
        %v736 = vadd.f32 %v727, %v734
        %v737 = vadd.f32 %v729, %v734
        %v738 = vadd.f32 %v731, %v734
        %v739 = vadd.f32 %v733, %v734
        %vm740 = vcmask 7168
        %741 = vst.msk [vmem:[%s226] sm:$0xff] %vm740, %v735
        %742 = vst.msk [vmem:[%s226 + $0x8] sm:$0xff] %vm740, %v736
        %743 = vst.msk [vmem:[%s226 + $0x10] sm:$0xff] %vm740, %v737
        %744 = vst.msk [vmem:[%s226 + $0x18] sm:$0xff] %vm740, %v738
        %745 = vst.msk [vmem:[%s226 + $0x20] sm:$0xff] %vm740, %v739
        %s746 = sand.u32 %s134, 1
        %s747 = sand.u32 %s134, 1
        %s748 = smul.addr %s747, 40
        %s749 = scalar_lea.vmem [#allocation2], %s748
        // Predicated region
        $region41: #{_lambda_.1} parent=39 // pred_check
          %p750 = pneg %p144
        $region42: #{_lambda_.1} parent=39 // pred_check_branch
          %752 = sbr.rel (%p750) target = $region44
        $region43: #{_lambda_.1} parent=39 // pred_region
          %s753 = smul.u32 5, %s16
          %s754 = ssub.s32 38, %s753
          %p755 = scmp.lt.s32.totalorder %s754, 5
          %s756 = scalar_select %p755, %s754, 5
          %s757 = smul.u32 8, %s756
          %p758 = scmp.ne.s32.totalorder 0, %s757
          %s759 = smul.addr %s753, 8
          %s760 = scalar_lea.vmem %s5, %s759
          // Predicated region
          $region45: #{_lambda_.1} parent=43 // pred_check
            %p761 = pneg %p758
          $region46: #{_lambda_.1} parent=43 // pred_check_branch
            %763 = sbr.rel (%p761) target = $region48
          $region47: #{_lambda_.1} parent=43 // pred_region
            // Predicated region
            $region49: #{_lambda_.1} parent=47 // pred_check
              _
            $region50: #{_lambda_.1} parent=47 // pred_check_branch
              %765 = sbr.rel (0) target = $region52
            $region51: #{_lambda_.1} parent=47 // pred_region
              // Predicated region
              $region71: #{_lambda_.1} parent=51 // pred_check
                _
              $region72: #{_lambda_.1} parent=51 // pred_check_branch
                %824 = sbr.rel (0) target = $region74
              $region73: #{_lambda_.1} parent=51 // pred_region
                %s825 = sdiv.u32.pop %s756, 5
                %s826 = srem.u32.pop %s756, 5
                // While loop
                $region75: #{_lambda_.1} parent=73 // loop_pre_header
                  _
                $region76: #{_lambda_.1} parent=73 // loop_header
                  %s828 = sphi 0, %s830
                  %p829 = scmp.ge.s32.totalorder %s828, %s825
                  %s833 = sphi 0, %s848
                  %s834 = sphi %s749, %s851
                  %s835 = sphi %s760, %s852
                $region77: #{_lambda_.1} parent=73 // loop_header_branch
                  %832 = sbr.rel (%p829) target = $region81
                $region78: #{_lambda_.1} parent=73 // loop_body
                  %v836 = vld [vmem:[%s834] sm:$0xff]
                  %837 = vst [vmem:[%s835] sm:$0xff] %v836
                  %v838 = vld [vmem:[%s834 + $0x8] sm:$0xff]
                  %839 = vst [vmem:[%s835 + $0x8] sm:$0xff] %v838
                  %v840 = vld [vmem:[%s834 + $0x10] sm:$0xff]
                  %841 = vst [vmem:[%s835 + $0x10] sm:$0xff] %v840
                  %v842 = vld [vmem:[%s834 + $0x18] sm:$0xff]
                  %843 = vst [vmem:[%s835 + $0x18] sm:$0xff] %v842
                  %v844 = vld [vmem:[%s834 + $0x20] sm:$0xff]
                  %845 = vst [vmem:[%s835 + $0x20] sm:$0xff] %v844
                  %s846 = sadd.s32 1, %s833
                  %p847 = scmp.ge.s32.totalorder %s846, %s825
                  %s848 = scalar_select %p847, 0, %s846
                  %s849 = smul.u32 %s848, 40
                  %s850 = smul.u32 %s848, 40
                  %s851 = scalar_lea.vmem %s749, %s849 [#allocation2]
                  %s852 = scalar_lea.vmem %s760, %s850
                $region79: #{_lambda_.1} parent=73 // loop_footer
                  %s830 = sadd.s32 %s828, 1
                $region80: #{_lambda_.1} parent=73 // loop_footer_branch
                  %827 = sbr.rel target = $region76
                $region81: #{_lambda_.1} parent=73 // loop_exit
                  _
                %s853 = sdiv.u32.pop %s756, 5
                %s854 = srem.u32.pop %s756, 5
                %s855 = smul.u32 %s853, 5
                %s856 = smul.u32 8, %s855
                %s857 = scalar_lea.vmem %s749, %s856 [#allocation2]
                %s858 = smul.u32 8, %s855
                %s859 = scalar_lea.vmem %s760, %s858
                // While loop
                $region82: #{_lambda_.1} parent=73 // loop_pre_header
                  _
                $region83: #{_lambda_.1} parent=73 // loop_header
                  %s861 = sphi 0, %s863
                  %p862 = scmp.ge.s32.totalorder %s861, %s854
                  %s866 = sphi 0, %s873
                  %s867 = sphi %s857, %s876
                  %s868 = sphi %s859, %s877
                $region84: #{_lambda_.1} parent=73 // loop_header_branch
                  %865 = sbr.rel (%p862) target = $region88
                $region85: #{_lambda_.1} parent=73 // loop_body
                  %v869 = vld [vmem:[%s867] sm:$0xff]
                  %870 = vst [vmem:[%s868] sm:$0xff] %v869
                  %s871 = sadd.s32 1, %s866
                  %p872 = scmp.ge.s32.totalorder %s871, %s854
                  %s873 = scalar_select %p872, 0, %s871
                  %s874 = smul.u32 %s873, 8
                  %s875 = smul.u32 %s873, 8
                  %s876 = scalar_lea.vmem %s857, %s874 [#allocation2]
                  %s877 = scalar_lea.vmem %s859, %s875
                $region86: #{_lambda_.1} parent=73 // loop_footer
                  %s863 = sadd.s32 %s861, 1
                $region87: #{_lambda_.1} parent=73 // loop_footer_branch
                  %860 = sbr.rel target = $region83
                $region88: #{_lambda_.1} parent=73 // loop_exit
                  _
              $region74: #{_lambda_.1} parent=51 // pred_fallthru
                _
              // Predicated region
              $region89: #{_lambda_.1} parent=51 // pred_check
                _
              $region90: #{_lambda_.1} parent=51 // pred_check_branch
                %879 = sbr.rel target = $region92
              $region91: #{_lambda_.1} parent=51 // pred_region
                _
              $region92: #{_lambda_.1} parent=51 // pred_fallthru
                _
            $region52: #{_lambda_.1} parent=47 // pred_fallthru
              _
            // Predicated region
            $region53: #{_lambda_.1} parent=47 // pred_check
              _
            $region54: #{_lambda_.1} parent=47 // pred_check_branch
              %767 = sbr.rel target = $region56
            $region55: #{_lambda_.1} parent=47 // pred_region
              %s769 = ssub.s32 256, 1
              %s770 = sdiv.u32.pop %s756, 5
              %s771 = srem.u32.pop %s756, 5
              // While loop
              $region57: #{_lambda_.1} parent=55 // loop_pre_header
                _
              $region58: #{_lambda_.1} parent=55 // loop_header
                %s773 = sphi 0, %s775
                %p774 = scmp.ge.s32.totalorder %s773, %s770
                %s778 = sphi 0, %s793
                %s779 = sphi %s749, %s796
                %s780 = sphi %s760, %s797
              $region59: #{_lambda_.1} parent=55 // loop_header_branch
                %777 = sbr.rel (%p774) target = $region63
              $region60: #{_lambda_.1} parent=55 // loop_body
                %v781 = vld [vmem:[%s779] sm:%s769]
                %782 = vst [vmem:[%s780] sm:%s769] %v781
                %v783 = vld [vmem:[%s779 + $0x8] sm:%s769]
                %784 = vst [vmem:[%s780 + $0x8] sm:%s769] %v783
                %v785 = vld [vmem:[%s779 + $0x10] sm:%s769]
                %786 = vst [vmem:[%s780 + $0x10] sm:%s769] %v785
                %v787 = vld [vmem:[%s779 + $0x18] sm:%s769]
                %788 = vst [vmem:[%s780 + $0x18] sm:%s769] %v787
                %v789 = vld [vmem:[%s779 + $0x20] sm:%s769]
                %790 = vst [vmem:[%s780 + $0x20] sm:%s769] %v789
                %s791 = sadd.s32 1, %s778
                %p792 = scmp.ge.s32.totalorder %s791, %s770
                %s793 = scalar_select %p792, 0, %s791
                %s794 = smul.u32 %s793, 40
                %s795 = smul.u32 %s793, 40
                %s796 = scalar_lea.vmem %s749, %s794 [#allocation2]
                %s797 = scalar_lea.vmem %s760, %s795
              $region61: #{_lambda_.1} parent=55 // loop_footer
                %s775 = sadd.s32 %s773, 1
              $region62: #{_lambda_.1} parent=55 // loop_footer_branch
                %772 = sbr.rel target = $region58
              $region63: #{_lambda_.1} parent=55 // loop_exit
                _
              %s798 = sdiv.u32.pop %s756, 5
              %s799 = srem.u32.pop %s756, 5
              %s800 = smul.u32 %s798, 5
              %s801 = smul.u32 8, %s800
              %s802 = scalar_lea.vmem %s749, %s801 [#allocation2]
              %s803 = smul.u32 8, %s800
              %s804 = scalar_lea.vmem %s760, %s803
              // While loop
              $region64: #{_lambda_.1} parent=55 // loop_pre_header
                _
              $region65: #{_lambda_.1} parent=55 // loop_header
                %s806 = sphi 0, %s808
                %p807 = scmp.ge.s32.totalorder %s806, %s799
                %s811 = sphi 0, %s818
                %s812 = sphi %s802, %s821
                %s813 = sphi %s804, %s822
              $region66: #{_lambda_.1} parent=55 // loop_header_branch
                %810 = sbr.rel (%p807) target = $region70
              $region67: #{_lambda_.1} parent=55 // loop_body
                %v814 = vld [vmem:[%s812] sm:%s769]
                %815 = vst [vmem:[%s813] sm:%s769] %v814
                %s816 = sadd.s32 1, %s811
                %p817 = scmp.ge.s32.totalorder %s816, %s799
                %s818 = scalar_select %p817, 0, %s816
                %s819 = smul.u32 %s818, 8
                %s820 = smul.u32 %s818, 8
                %s821 = scalar_lea.vmem %s802, %s819 [#allocation2]
                %s822 = scalar_lea.vmem %s804, %s820
              $region68: #{_lambda_.1} parent=55 // loop_footer
                %s808 = sadd.s32 %s806, 1
              $region69: #{_lambda_.1} parent=55 // loop_footer_branch
                %805 = sbr.rel target = $region65
              $region70: #{_lambda_.1} parent=55 // loop_exit
                _
            $region56: #{_lambda_.1} parent=47 // pred_fallthru
              _
          $region48: #{_lambda_.1} parent=43 // pred_fallthru
            _
          %880 = vnop
        $region44: #{_lambda_.1} parent=39 // pred_fallthru
          _
      $region40: #{_lambda_.1} parent=5 // pred_fallthru
        _
      %p881 = scmp.le.s32.totalorder 2, %s11
      // Predicated region
      $region93: #{_lambda_.1} parent=5 // pred_check
        %p882 = pneg %p881
      $region94: #{_lambda_.1} parent=5 // pred_check_branch
        %884 = sbr.rel (%p882) target = $region96
      $region95: #{_lambda_.1} parent=5 // pred_region
        %s885 = ssub.s32 %s11, 2
        // Predicated region
        $region97: #{_lambda_.1} parent=95 // pred_check
          %p886 = pneg %p150
        $region98: #{_lambda_.1} parent=95 // pred_check_branch
          %888 = sbr.rel (%p886) target = $region100
        $region99: #{_lambda_.1} parent=95 // pred_region
          %s889 = sand.u32 %s135, 1
          %s890 = sand.u32 %s135, 1
          %s891 = smul.addr %s890, 40
          %s892 = scalar_lea.vmem [#allocation2], %s891
        $region100: #{_lambda_.1} parent=95 // pred_fallthru
          _
      $region96: #{_lambda_.1} parent=5 // pred_fallthru
        _
    $region6: #{_lambda_.1} parent=1 // loop_footer
      %s15 = sadd.s32 1, %s11
    $region7: #{_lambda_.1} parent=1 // loop_footer_branch
      %10 = sbr.rel target = $region3
    $region8: #{_lambda_.1} parent=1 // loop_exit
      _

</llo_original>
